<compile_context>
chip_gen: v5e
topology: v5e:2x2
jax: 0.10.0
libtpu: 0.0.40
codegen_flags: <defaults>
</compile_context>

<pallas_src>
import numpy as np

import jax
import jax.numpy as jnp
from jax.experimental import pallas as pl
from jax.experimental.pallas import tpu as pltpu

# Problem sizes (half-resolution attention input of a size=16 CWT4, i.e. spatial 8).
B, C, H, W = 2, 4, 8, 8
HW = H * W              # in_feature = 64
F = H                   # out_feature; must equal H for torch.matmul(att, v) to be shape-valid
KS = 3
CENTER = (KS * KS) // 2
BC = B * C              # 8 working rows: row r = b*C + c

# ---- packed parameter slab layout (single fp32 operand, packed once on the host) ----
_MIX_R0 = 0                   # rows   0:24 : cols 0:8 Wa, cols 8:16 Wb, col 16 fused bias
_LNB_R0 = _MIX_R0 + 3 * BC    # rows  24:40 : cols 0:16 linear-layer bias slab
_LIN_R0 = _LNB_R0 + 2 * BC    # rows  40:104: cols 0:16 [query_line.T | key_line.T]
_QP_R0 = _LIN_R0 + HW         # rows 104:176: 9 pre-broadcast (8,64) depthwise-q tap planes
_KP_R0 = _QP_R0 + KS * KS * BC    # rows 176:248: 9 depthwise-k tap planes
_S_R0 = _KP_R0 + KS * KS * BC     # rows 248:760: 8 (64,64) shift+halo matrices
P_ROWS = _S_R0 + (KS * KS - 1) * HW   # 760
P_COLS = HW                           # 64


def cwt_attention_kernel(x_ref, p_ref, out_ref):
    # x_ref  : (B*C, H*W) activations; row r = (b, c), lane p = h*W + w
    # p_ref  : (P_ROWS, P_COLS) packed parameters
    # out_ref: (B*C, F*W)
    x = x_ref[...]                                                     # (8, 64)

    # ---- fused depthwise 3x3 convs (q and k share every shifted image) -----------------
    # Neighbour taps come from x @ S_t with 0/1 shift matrices that already encode the zero
    # 'same' padding, so there is no padded tensor, no iota/mask and no relayout in-kernel;
    # tap weights are pre-broadcast (8, 64) planes, so the unrolled loop has no broadcasts.
    acc_q = p_ref[_QP_R0 + CENTER * BC:_QP_R0 + (CENTER + 1) * BC, :] * x
    acc_k = p_ref[_KP_R0 + CENTER * BC:_KP_R0 + (CENTER + 1) * BC, :] * x
    j = 0
    for idx in range(KS * KS):
        if idx == CENTER:
            continue
        s_mat = p_ref[_S_R0 + j * HW:_S_R0 + (j + 1) * HW, :]          # (64, 64)
        shifted = jnp.dot(x, s_mat, preferred_element_type=jnp.float32)  # (8, 64)
        acc_q = acc_q + p_ref[_QP_R0 + idx * BC:_QP_R0 + (idx + 1) * BC, :] * shifted
        acc_k = acc_k + p_ref[_KP_R0 + idx * BC:_KP_R0 + (idx + 1) * BC, :] * shifted
        j += 1

    # ---- all channel mixing as two small block-diagonal matmuls ------------------------
    # rows 0:8   -> v = point_q(dw_q) + point_k(dw_k)         (all conv biases folded)
    # rows 8:16  -> s_w[c] * query_conv(point_q(dw_q))  per (b, c) row
    # rows 16:24 ->          key_conv(point_q(dw_q))    per (b, c) row
    w_a = p_ref[_MIX_R0:_MIX_R0 + 3 * BC, 0:BC]                        # (24, 8)
    w_b = p_ref[_MIX_R0:_MIX_R0 + 3 * BC, BC:2 * BC]                   # (24, 8)
    b_mix = p_ref[_MIX_R0:_MIX_R0 + 3 * BC, 2 * BC:2 * BC + 1]         # (24, 1)
    mixed = (jnp.dot(w_a, acc_q, preferred_element_type=jnp.float32)
             + jnp.dot(w_b, acc_k, preferred_element_type=jnp.float32)
             + b_mix)                                                  # (24, 64)
    v = mixed[0:BC, :]                                                 # (8, 64)
    lin_in = mixed[BC:3 * BC, :]                                       # (16, 64)

    # ---- query_line / key_line: one matmul against the stacked weight slab -------------
    lin_w = p_ref[_LIN_R0:_LIN_R0 + HW, 0:2 * F]                       # (64, 16)
    lin_b = p_ref[_LNB_R0:_LNB_R0 + 2 * BC, 0:2 * F]                   # (16, 16)
    lin = jnp.dot(lin_in, lin_w, preferred_element_type=jnp.float32) + lin_b   # (16, 16)
    ql = lin[0:BC, 0:F]                                                # (8, 8) = s_w[c]*qf[b]
    kl = lin[BC:2 * BC, F:2 * F]                                       # (8, 8) =        kf[b]

    # ---- attention map + softmax (s_conv scale folded into ql; its bias cancels) -------
    att = ql[:, :, None] * kl[:, None, :]                              # (B*C, F, F)
    m = jnp.max(att, axis=-1, keepdims=True)
    e = jnp.exp(att - m)
    att = e * pl.reciprocal(jnp.sum(e, axis=-1, keepdims=True), approx=True)

    # ---- out[b,c] = att[b,c] @ v[b,c] ---------------------------------------------------
    vr = v.reshape(BC, H, W)
    out = jax.lax.dot_general(att, vr, (((2,), (1,)), ((0,), (0,))),
                              preferred_element_type=jnp.float32)      # (B*C, F, W)
    out_ref[...] = out.reshape(BC, F * W).astype(out_ref.dtype)


def pack_params(p):
    """Pack all parameter tensors into ONE fp32 slab. Host-side numpy, done once at init."""
    g = lambda a: np.asarray(a, dtype=np.float32)
    dwq_w, dwq_b = g(p["dwq_w"]).reshape(C, KS * KS), g(p["dwq_b"])
    dwk_w, dwk_b = g(p["dwk_w"]).reshape(C, KS * KS), g(p["dwk_b"])
    pwq_w, pwq_b = g(p["pwq_w"]).reshape(C, C), g(p["pwq_b"])
    pwk_w, pwk_b = g(p["pwk_w"]).reshape(C, C), g(p["pwk_b"])
    qc_w, qc_b = g(p["qc_w"]).reshape(C), g(p["qc_b"])
    kc_w, kc_b = g(p["kc_w"]).reshape(C), g(p["kc_b"])
    ql_w, ql_b = g(p["ql_w"]), g(p["ql_b"])
    kl_w, kl_b = g(p["kl_w"]), g(p["kl_b"])
    s_w = g(p["s_w"]).reshape(C)          # s_conv bias is dropped: constant over softmax axis

    eye_b = np.eye(B, dtype=np.float32)
    pw_q_blk = np.kron(eye_b, pwq_w)                                   # (8, 8)
    pw_k_blk = np.kron(eye_b, pwk_w)

    # query/key 1x1 convs folded through pointwise-q (attention head reads q; see TODO)
    fq = qc_w @ pwq_w                                                  # (C,)
    fk = kc_w @ pwq_w
    b_qv = float(fq @ dwq_b + qc_w @ pwq_b + qc_b[0])
    b_kv = float(fk @ dwq_b + kc_w @ pwq_b + kc_b[0])

    q_rep = np.zeros((BC, BC), np.float32)   # row b*C+c : s_w[c]*fq in batch-b column block
    k_rep = np.zeros((BC, BC), np.float32)   # row b*C+c :        fk in batch-b column block
    for b in range(B):
        for c in range(C):
            q_rep[b * C + c, b * C:(b + 1) * C] = s_w[c] * fq
            k_rep[b * C + c, b * C:(b + 1) * C] = fk
    w_a = np.concatenate([pw_q_blk, q_rep, k_rep], axis=0)             # (24, 8)
    w_b = np.concatenate([pw_k_blk, np.zeros((2 * BC, BC), np.float32)], axis=0)

    b_v = (pw_q_blk @ np.tile(dwq_b, B) + pw_k_blk @ np.tile(dwk_b, B)
           + np.tile(pwq_b + pwk_b, B))
    b_mix = np.concatenate([b_v, np.tile(s_w * b_qv, B),
                            np.full(BC, b_kv, np.float32)])            # (24,)

    lin_w = np.concatenate([ql_w.T, kl_w.T], axis=1)                   # (64, 16)
    lin_b = np.zeros((2 * BC, 2 * F), np.float32)
    lin_b[0:BC, 0:F] = np.tile(s_w, B)[:, None] * ql_b[None, :]        # s_conv scale folded
    lin_b[BC:2 * BC, F:2 * F] = kl_b[None, :]

    # pre-broadcast per-(b,c)-row depthwise tap weight planes
    qp = np.tile(dwq_w, (B, 1))[:, :, None] * np.ones((1, 1, HW), np.float32)  # (8, 9, 64)
    kp = np.tile(dwk_w, (B, 1))[:, :, None] * np.ones((1, 1, HW), np.float32)

    # 0/1 shift matrices for the 8 non-centre taps, zero 'same' padding folded in
    s_mats = []
    for idx in range(KS * KS):
        if idx == CENTER:
            continue
        dh, dw = idx // KS - 1, idx % KS - 1
        sm = np.zeros((HW, HW), np.float32)
        for h in range(H):
            for w in range(W):
                h2, w2 = h + dh, w + dw
                if 0 <= h2 < H and 0 <= w2 < W:
                    sm[h2 * W + w2, h * W + w] = 1.0
        s_mats.append(sm)

    slab = np.zeros((P_ROWS, P_COLS), np.float32)
    slab[_MIX_R0:_MIX_R0 + 3 * BC, 0:BC] = w_a
    slab[_MIX_R0:_MIX_R0 + 3 * BC, BC:2 * BC] = w_b
    slab[_MIX_R0:_MIX_R0 + 3 * BC, 2 * BC] = b_mix
    slab[_LNB_R0:_LNB_R0 + 2 * BC, 0:2 * F] = lin_b
    slab[_LIN_R0:_LIN_R0 + HW, 0:2 * F] = lin_w
    for t in range(KS * KS):
        slab[_QP_R0 + t * BC:_QP_R0 + (t + 1) * BC, 0:HW] = qp[:, t, :]
        slab[_KP_R0 + t * BC:_KP_R0 + (t + 1) * BC, 0:HW] = kp[:, t, :]
    for j, sm in enumerate(s_mats):
        slab[_S_R0 + j * HW:_S_R0 + (j + 1) * HW, 0:HW] = sm
    return jnp.asarray(slab)


# Grid-less single-invocation call: whole arrays resident in VMEM, 2 input DMAs, 1 output DMA.
# For large batched production use on v7x (2 TensorCores/chip) add a leading "parallel" grid
# axis over batch groups; at B=2 everything fits one invocation (no grid, no pipelining).
_attention_call = pl.pallas_call(
    cwt_attention_kernel,
    out_shape=jax.ShapeDtypeStruct((BC, HW), jnp.float32),
    in_specs=[pl.BlockSpec(memory_space=pltpu.MemorySpace.VMEM),
              pl.BlockSpec(memory_space=pltpu.MemorySpace.VMEM)],
    out_specs=pl.BlockSpec(memory_space=pltpu.MemorySpace.VMEM),
    cost_estimate=pl.CostEstimate(flops=700_000, transcendentals=700,
                                  bytes_accessed=200_000),
)


@jax.jit
def cwt4_conv_attention(x, pslab):
    # (B, C, H, W) <-> (B*C, H*W) are contiguous (free) reshapes: no pad / transpose HLOs.
    out2d = _attention_call(x.reshape(BC, HW), pslab)
    return out2d.reshape(B, C, F, W)


# ---------------- pure-JAX reference (for correctness check) ----------------
def _conv2d(x, w, b, groups=1):
    y = jax.lax.conv_general_dilated(
        x, w, window_strides=(1, 1), padding="SAME",
        dimension_numbers=("NCHW", "OIHW", "NCHW"),
        feature_group_count=groups)
    return y + b[None, :, None, None]


def reference(x, p):
    dq = _conv2d(x, p["dwq_w"], p["dwq_b"], groups=C)
    q = _conv2d(dq, p["pwq_w"], p["pwq_b"])
    dk = _conv2d(x, p["dwk_w"], p["dwk_b"], groups=C)
    k = _conv2d(dk, p["pwk_w"], p["pwk_b"])
    v = q + k
    qc = _conv2d(q, p["qc_w"], p["qc_b"]).reshape(B, HW)
    kc = _conv2d(q, p["kc_w"], p["kc_b"]).reshape(B, HW)
    qf = qc @ p["ql_w"].T + p["ql_b"]                          # (B, F)
    kf = kc @ p["kl_w"].T + p["kl_b"]                          # (B, F)
    att = (qf[:, :, None] * kf[:, None, :])[:, None]           # (B, 1, F, F)
    att = _conv2d(att, p["s_w"], p["s_b"])                     # (B, C, F, F)
    att = jax.nn.softmax(att, axis=-1)
    return jnp.einsum("bcij,bcjw->bciw", att, v)               # (B, C, F, W)


def init_params(key):
    ks = jax.random.split(key, 18)
    n = lambda k, shape: jax.random.normal(k, shape, jnp.float32) * 0.1
    return dict(
        dwq_w=n(ks[0], (C, 1, KS, KS)), dwq_b=n(ks[1], (C,)),
        pwq_w=n(ks[2], (C, C, 1, 1)),   pwq_b=n(ks[3], (C,)),
        dwk_w=n(ks[4], (C, 1, KS, KS)), dwk_b=n(ks[5], (C,)),
        pwk_w=n(ks[6], (C, C, 1, 1)),   pwk_b=n(ks[7], (C,)),
        qc_w=n(ks[8], (1, C, 1, 1)),    qc_b=n(ks[9], (1,)),
        kc_w=n(ks[10], (1, C, 1, 1)),   kc_b=n(ks[11], (1,)),
        ql_w=n(ks[12], (F, HW)),        ql_b=n(ks[13], (F,)),
        kl_w=n(ks[14], (F, HW)),        kl_b=n(ks[15], (F,)),
        s_w=n(ks[16], (C, 1, 1, 1)),    s_b=n(ks[17], (C,)),
    )


if __name__ == "__main__":
    key = jax.random.PRNGKey(0)
    kx, kp = jax.random.split(key)
    x = jax.random.normal(kx, (B, C, H, W), jnp.float32)
    params = init_params(kp)
    pslab = pack_params(params)           # packed ONCE at init (host-side numpy), one operand

    out = cwt4_conv_attention(x, pslab)
    out = jax.block_until_ready(out)

    ref = reference(x, params)
    assert out.shape == (B, C, F, W), out.shape
    # tolerance accounts for the EUP approximate reciprocal in the softmax (per the review)
    # and the offline folding of the 1x1 convs / s_conv scale (fp32 reassociation).
    err = float(jnp.max(jnp.abs(out - ref)))
    assert jnp.allclose(out, ref, rtol=2e-3, atol=2e-3), err
    print("KERNEL_OK")
</pallas_src>

<mosaic_0001>
module attributes {stable_mosaic.version = 11 : i64} {
  func.func @cwt_attention_kernel(%arg0: memref<8x64xf32, #tpu.memory_space<vmem>>, %arg1: memref<760x64xf32, #tpu.memory_space<vmem>>, %arg2: memref<8x64xf32, #tpu.memory_space<vmem>>) attributes {dimension_semantics = [], scalar_prefetch = 0 : i64, scratch_operands = 0 : i64, tpu.core_type = #tpu.core_type<tc>} {
    %c0 = arith.constant 0 : index
    %c0_0 = arith.constant 0 : index
    %0 = vector.load %arg0[%c0, %c0_0] : memref<8x64xf32, #tpu.memory_space<vmem>>, vector<8x64xf32>
    %c136 = arith.constant 136 : index
    %c0_1 = arith.constant 0 : index
    %1 = vector.load %arg1[%c136, %c0_1] : memref<760x64xf32, #tpu.memory_space<vmem>>, vector<8x64xf32>
    %2 = arith.mulf %1, %0 : vector<8x64xf32>
    %c208 = arith.constant 208 : index
    %c0_2 = arith.constant 0 : index
    %3 = vector.load %arg1[%c208, %c0_2] : memref<760x64xf32, #tpu.memory_space<vmem>>, vector<8x64xf32>
    %4 = arith.mulf %3, %0 : vector<8x64xf32>
    %c248 = arith.constant 248 : index
    %c0_3 = arith.constant 0 : index
    %5 = vector.load %arg1[%c248, %c0_3] : memref<760x64xf32, #tpu.memory_space<vmem>>, vector<64x64xf32>
    %cst = arith.constant dense<0.000000e+00> : vector<8x64xf32>
    %6 = tpu.matmul %0, %5, %cst {dimension_numbers = #tpu.dot_dimension_numbers<[1], [0], [0], [1], [0, 0, 1, 1], [], []>} : vector<8x64xf32>, vector<64x64xf32>, vector<8x64xf32> -> vector<8x64xf32>
    %c104 = arith.constant 104 : index
    %c0_4 = arith.constant 0 : index
    %7 = vector.load %arg1[%c104, %c0_4] : memref<760x64xf32, #tpu.memory_space<vmem>>, vector<8x64xf32>
    %8 = arith.mulf %7, %6 : vector<8x64xf32>
    %9 = arith.addf %2, %8 : vector<8x64xf32>
    %c176 = arith.constant 176 : index
    %c0_5 = arith.constant 0 : index
    %10 = vector.load %arg1[%c176, %c0_5] : memref<760x64xf32, #tpu.memory_space<vmem>>, vector<8x64xf32>
    %11 = arith.mulf %10, %6 : vector<8x64xf32>
    %12 = arith.addf %4, %11 : vector<8x64xf32>
    %c312 = arith.constant 312 : index
    %c0_6 = arith.constant 0 : index
    %13 = vector.load %arg1[%c312, %c0_6] : memref<760x64xf32, #tpu.memory_space<vmem>>, vector<64x64xf32>
    %cst_7 = arith.constant dense<0.000000e+00> : vector<8x64xf32>
    %14 = tpu.matmul %0, %13, %cst_7 {dimension_numbers = #tpu.dot_dimension_numbers<[1], [0], [0], [1], [0, 0, 1, 1], [], []>} : vector<8x64xf32>, vector<64x64xf32>, vector<8x64xf32> -> vector<8x64xf32>
    %c112 = arith.constant 112 : index
    %c0_8 = arith.constant 0 : index
    %15 = vector.load %arg1[%c112, %c0_8] : memref<760x64xf32, #tpu.memory_space<vmem>>, vector<8x64xf32>
    %16 = arith.mulf %15, %14 : vector<8x64xf32>
    %17 = arith.addf %9, %16 : vector<8x64xf32>
    %c184 = arith.constant 184 : index
    %c0_9 = arith.constant 0 : index
    %18 = vector.load %arg1[%c184, %c0_9] : memref<760x64xf32, #tpu.memory_space<vmem>>, vector<8x64xf32>
    %19 = arith.mulf %18, %14 : vector<8x64xf32>
    %20 = arith.addf %12, %19 : vector<8x64xf32>
    %c376 = arith.constant 376 : index
    %c0_10 = arith.constant 0 : index
    %21 = vector.load %arg1[%c376, %c0_10] : memref<760x64xf32, #tpu.memory_space<vmem>>, vector<64x64xf32>
    %cst_11 = arith.constant dense<0.000000e+00> : vector<8x64xf32>
    %22 = tpu.matmul %0, %21, %cst_11 {dimension_numbers = #tpu.dot_dimension_numbers<[1], [0], [0], [1], [0, 0, 1, 1], [], []>} : vector<8x64xf32>, vector<64x64xf32>, vector<8x64xf32> -> vector<8x64xf32>
    %c120 = arith.constant 120 : index
    %c0_12 = arith.constant 0 : index
    %23 = vector.load %arg1[%c120, %c0_12] : memref<760x64xf32, #tpu.memory_space<vmem>>, vector<8x64xf32>
    %24 = arith.mulf %23, %22 : vector<8x64xf32>
    %25 = arith.addf %17, %24 : vector<8x64xf32>
    %c192 = arith.constant 192 : index
    %c0_13 = arith.constant 0 : index
    %26 = vector.load %arg1[%c192, %c0_13] : memref<760x64xf32, #tpu.memory_space<vmem>>, vector<8x64xf32>
    %27 = arith.mulf %26, %22 : vector<8x64xf32>
    %28 = arith.addf %20, %27 : vector<8x64xf32>
    %c440 = arith.constant 440 : index
    %c0_14 = arith.constant 0 : index
    %29 = vector.load %arg1[%c440, %c0_14] : memref<760x64xf32, #tpu.memory_space<vmem>>, vector<64x64xf32>
    %cst_15 = arith.constant dense<0.000000e+00> : vector<8x64xf32>
    %30 = tpu.matmul %0, %29, %cst_15 {dimension_numbers = #tpu.dot_dimension_numbers<[1], [0], [0], [1], [0, 0, 1, 1], [], []>} : vector<8x64xf32>, vector<64x64xf32>, vector<8x64xf32> -> vector<8x64xf32>
    %c128 = arith.constant 128 : index
    %c0_16 = arith.constant 0 : index
    %31 = vector.load %arg1[%c128, %c0_16] : memref<760x64xf32, #tpu.memory_space<vmem>>, vector<8x64xf32>
    %32 = arith.mulf %31, %30 : vector<8x64xf32>
    %33 = arith.addf %25, %32 : vector<8x64xf32>
    %c200 = arith.constant 200 : index
    %c0_17 = arith.constant 0 : index
    %34 = vector.load %arg1[%c200, %c0_17] : memref<760x64xf32, #tpu.memory_space<vmem>>, vector<8x64xf32>
    %35 = arith.mulf %34, %30 : vector<8x64xf32>
    %36 = arith.addf %28, %35 : vector<8x64xf32>
    %c504 = arith.constant 504 : index
    %c0_18 = arith.constant 0 : index
    %37 = vector.load %arg1[%c504, %c0_18] : memref<760x64xf32, #tpu.memory_space<vmem>>, vector<64x64xf32>
    %cst_19 = arith.constant dense<0.000000e+00> : vector<8x64xf32>
    %38 = tpu.matmul %0, %37, %cst_19 {dimension_numbers = #tpu.dot_dimension_numbers<[1], [0], [0], [1], [0, 0, 1, 1], [], []>} : vector<8x64xf32>, vector<64x64xf32>, vector<8x64xf32> -> vector<8x64xf32>
    %c144 = arith.constant 144 : index
    %c0_20 = arith.constant 0 : index
    %39 = vector.load %arg1[%c144, %c0_20] : memref<760x64xf32, #tpu.memory_space<vmem>>, vector<8x64xf32>
    %40 = arith.mulf %39, %38 : vector<8x64xf32>
    %41 = arith.addf %33, %40 : vector<8x64xf32>
    %c216 = arith.constant 216 : index
    %c0_21 = arith.constant 0 : index
    %42 = vector.load %arg1[%c216, %c0_21] : memref<760x64xf32, #tpu.memory_space<vmem>>, vector<8x64xf32>
    %43 = arith.mulf %42, %38 : vector<8x64xf32>
    %44 = arith.addf %36, %43 : vector<8x64xf32>
    %c568 = arith.constant 568 : index
    %c0_22 = arith.constant 0 : index
    %45 = vector.load %arg1[%c568, %c0_22] : memref<760x64xf32, #tpu.memory_space<vmem>>, vector<64x64xf32>
    %cst_23 = arith.constant dense<0.000000e+00> : vector<8x64xf32>
    %46 = tpu.matmul %0, %45, %cst_23 {dimension_numbers = #tpu.dot_dimension_numbers<[1], [0], [0], [1], [0, 0, 1, 1], [], []>} : vector<8x64xf32>, vector<64x64xf32>, vector<8x64xf32> -> vector<8x64xf32>
    %c152 = arith.constant 152 : index
    %c0_24 = arith.constant 0 : index
    %47 = vector.load %arg1[%c152, %c0_24] : memref<760x64xf32, #tpu.memory_space<vmem>>, vector<8x64xf32>
    %48 = arith.mulf %47, %46 : vector<8x64xf32>
    %49 = arith.addf %41, %48 : vector<8x64xf32>
    %c224 = arith.constant 224 : index
    %c0_25 = arith.constant 0 : index
    %50 = vector.load %arg1[%c224, %c0_25] : memref<760x64xf32, #tpu.memory_space<vmem>>, vector<8x64xf32>
    %51 = arith.mulf %50, %46 : vector<8x64xf32>
    %52 = arith.addf %44, %51 : vector<8x64xf32>
    %c632 = arith.constant 632 : index
    %c0_26 = arith.constant 0 : index
    %53 = vector.load %arg1[%c632, %c0_26] : memref<760x64xf32, #tpu.memory_space<vmem>>, vector<64x64xf32>
    %cst_27 = arith.constant dense<0.000000e+00> : vector<8x64xf32>
    %54 = tpu.matmul %0, %53, %cst_27 {dimension_numbers = #tpu.dot_dimension_numbers<[1], [0], [0], [1], [0, 0, 1, 1], [], []>} : vector<8x64xf32>, vector<64x64xf32>, vector<8x64xf32> -> vector<8x64xf32>
    %c160 = arith.constant 160 : index
    %c0_28 = arith.constant 0 : index
    %55 = vector.load %arg1[%c160, %c0_28] : memref<760x64xf32, #tpu.memory_space<vmem>>, vector<8x64xf32>
    %56 = arith.mulf %55, %54 : vector<8x64xf32>
    %57 = arith.addf %49, %56 : vector<8x64xf32>
    %c232 = arith.constant 232 : index
    %c0_29 = arith.constant 0 : index
    %58 = vector.load %arg1[%c232, %c0_29] : memref<760x64xf32, #tpu.memory_space<vmem>>, vector<8x64xf32>
    %59 = arith.mulf %58, %54 : vector<8x64xf32>
    %60 = arith.addf %52, %59 : vector<8x64xf32>
    %c696 = arith.constant 696 : index
    %c0_30 = arith.constant 0 : index
    %61 = vector.load %arg1[%c696, %c0_30] : memref<760x64xf32, #tpu.memory_space<vmem>>, vector<64x64xf32>
    %cst_31 = arith.constant dense<0.000000e+00> : vector<8x64xf32>
    %62 = tpu.matmul %0, %61, %cst_31 {dimension_numbers = #tpu.dot_dimension_numbers<[1], [0], [0], [1], [0, 0, 1, 1], [], []>} : vector<8x64xf32>, vector<64x64xf32>, vector<8x64xf32> -> vector<8x64xf32>
    %c168 = arith.constant 168 : index
    %c0_32 = arith.constant 0 : index
    %63 = vector.load %arg1[%c168, %c0_32] : memref<760x64xf32, #tpu.memory_space<vmem>>, vector<8x64xf32>
    %64 = arith.mulf %63, %62 : vector<8x64xf32>
    %65 = arith.addf %57, %64 : vector<8x64xf32>
    %c240 = arith.constant 240 : index
    %c0_33 = arith.constant 0 : index
    %66 = vector.load %arg1[%c240, %c0_33] : memref<760x64xf32, #tpu.memory_space<vmem>>, vector<8x64xf32>
    %67 = arith.mulf %66, %62 : vector<8x64xf32>
    %68 = arith.addf %60, %67 : vector<8x64xf32>
    %c0_34 = arith.constant 0 : index
    %c0_35 = arith.constant 0 : index
    %69 = vector.load %arg1[%c0_34, %c0_35] : memref<760x64xf32, #tpu.memory_space<vmem>>, vector<24x8xf32>
    %c0_36 = arith.constant 0 : index
    %c8 = arith.constant 8 : index
    %70 = vector.load %arg1[%c0_36, %c8] : memref<760x64xf32, #tpu.memory_space<vmem>>, vector<24x8xf32>
    %c0_37 = arith.constant 0 : index
    %c16 = arith.constant 16 : index
    %71 = vector.load %arg1[%c0_37, %c16] : memref<760x64xf32, #tpu.memory_space<vmem>>, vector<24x1xf32>
    %cst_38 = arith.constant dense<0.000000e+00> : vector<24x64xf32>
    %72 = tpu.matmul %69, %65, %cst_38 {dimension_numbers = #tpu.dot_dimension_numbers<[1], [0], [0], [1], [0, 0, 1, 1], [], []>} : vector<24x8xf32>, vector<8x64xf32>, vector<24x64xf32> -> vector<24x64xf32>
    %cst_39 = arith.constant dense<0.000000e+00> : vector<24x64xf32>
    %73 = tpu.matmul %70, %68, %cst_39 {dimension_numbers = #tpu.dot_dimension_numbers<[1], [0], [0], [1], [0, 0, 1, 1], [], []>} : vector<24x8xf32>, vector<8x64xf32>, vector<24x64xf32> -> vector<24x64xf32>
    %74 = arith.addf %72, %73 : vector<24x64xf32>
    %75 = vector.broadcast %71 : vector<24x1xf32> to vector<24x64xf32>
    %76 = arith.addf %74, %75 : vector<24x64xf32>
    %77 = vector.extract_strided_slice %76 {offsets = [0, 0], sizes = [8, 64], strides = [1, 1]} : vector<24x64xf32> to vector<8x64xf32>
    %78 = vector.extract_strided_slice %76 {offsets = [8, 0], sizes = [16, 64], strides = [1, 1]} : vector<24x64xf32> to vector<16x64xf32>
    %c40 = arith.constant 40 : index
    %c0_40 = arith.constant 0 : index
    %79 = vector.load %arg1[%c40, %c0_40] : memref<760x64xf32, #tpu.memory_space<vmem>>, vector<64x16xf32>
    %c24 = arith.constant 24 : index
    %c0_41 = arith.constant 0 : index
    %80 = vector.load %arg1[%c24, %c0_41] : memref<760x64xf32, #tpu.memory_space<vmem>>, vector<16x16xf32>
    %cst_42 = arith.constant dense<0.000000e+00> : vector<16x16xf32>
    %81 = tpu.matmul %78, %79, %cst_42 {dimension_numbers = #tpu.dot_dimension_numbers<[1], [0], [0], [1], [0, 0, 1, 1], [], []>} : vector<16x64xf32>, vector<64x16xf32>, vector<16x16xf32> -> vector<16x16xf32>
    %82 = arith.addf %81, %80 : vector<16x16xf32>
    %83 = vector.extract_strided_slice %82 {offsets = [0, 0], sizes = [8, 8], strides = [1, 1]} : vector<16x16xf32> to vector<8x8xf32>
    %84 = vector.extract_strided_slice %82 {offsets = [8, 8], sizes = [8, 8], strides = [1, 1]} : vector<16x16xf32> to vector<8x8xf32>
    %85 = vector.shape_cast %83 : vector<8x8xf32> to vector<8x8x1xf32>
    %86 = vector.shape_cast %84 : vector<8x8xf32> to vector<8x1x8xf32>
    %87 = vector.broadcast %85 : vector<8x8x1xf32> to vector<8x8x8xf32>
    %88 = vector.broadcast %86 : vector<8x1x8xf32> to vector<8x8x8xf32>
    %89 = arith.mulf %87, %88 : vector<8x8x8xf32>
    %cst_43 = arith.constant dense<0xFF800000> : vector<8x8xf32>
    %90 = vector.multi_reduction <maximumf>, %89, %cst_43 [2] : vector<8x8x8xf32> to vector<8x8xf32>
    %91 = vector.shape_cast %90 : vector<8x8xf32> to vector<8x8x1xf32>
    %92 = vector.broadcast %91 : vector<8x8x1xf32> to vector<8x8x8xf32>
    %93 = arith.subf %89, %92 : vector<8x8x8xf32>
    %94 = math.exp %93 : vector<8x8x8xf32>
    %cst_44 = arith.constant dense<0.000000e+00> : vector<8x8xf32>
    %95 = vector.multi_reduction <add>, %94, %cst_44 [2] : vector<8x8x8xf32> to vector<8x8xf32>
    %96 = vector.shape_cast %95 : vector<8x8xf32> to vector<8x8x1xf32>
    %97 = tpu.reciprocal %96 {approx = true} : vector<8x8x1xf32> -> vector<8x8x1xf32>
    %98 = vector.broadcast %97 : vector<8x8x1xf32> to vector<8x8x8xf32>
    %99 = arith.mulf %94, %98 : vector<8x8x8xf32>
    %100 = vector.shape_cast %77 : vector<8x64xf32> to vector<8x8x8xf32>
    %cst_45 = arith.constant dense<0.000000e+00> : vector<8x8x8xf32>
    %101 = tpu.matmul %99, %100, %cst_45 {dimension_numbers = #tpu.dot_dimension_numbers<[2], [1], [1], [2], [0, 0, 0, 1, 1, 2], [0], [0]>} : vector<8x8x8xf32>, vector<8x8x8xf32>, vector<8x8x8xf32> -> vector<8x8x8xf32>
    %102 = vector.shape_cast %101 : vector<8x8x8xf32> to vector<8x64xf32>
    %c0_46 = arith.constant 0 : index
    %c0_47 = arith.constant 0 : index
    %103 = vector.load %arg2[%c0_46, %c0_47] : memref<8x64xf32, #tpu.memory_space<vmem>>, vector<8x64xf32>
    tpu.vector_store %arg2[%c0_46, %c0_47], %102 {strides = array<i32>} : memref<8x64xf32, #tpu.memory_space<vmem>>, vector<8x64xf32>,
    return
  }
}

</mosaic_0001>

<llo_original>
// kernel: cwt4_conv_attention.1
$region0: #{cwt4_conv_attention.1}
  #allocation0 [shape = 'u32[]', space=smem, size = 0x4, offset = 0x4, fixed_abs, tag = 'smem constant byte address 0x4 - core index']
  #allocation1 [shape = 'u32[72,128]{1,0:T(1,128)}', space=vmem, size = 0x9000, scoped, tag = 'internal scratch']
  %s0 = inlined_call_operand.vmem [shape: f32[8,64], index: 0, kind: input, shape index: {}]
  %s1 = inlined_call_operand.vmem [shape: f32[760,64], index: 1, kind: input, shape index: {}]
  %s2 = inlined_call_operand.vmem [shape: f32[8,64], index: 2, kind: output, shape index: {}]
  %s3 = sld [smem:[#allocation0]]
  $region18: #{cwt4_conv_attention.1} parent=0
    _
  %s5 = ssub.s32 1, %s3
  %s6 = scalar_select 0, %s5, %s3
  // Predicated region
  $region2: #{cwt4_conv_attention.1} parent=0 // pred_check
    _
  $region3: #{cwt4_conv_attention.1} parent=0 // pred_check_branch
    %8 = sbr.rel (0) target = $region5
  $region4: #{cwt4_conv_attention.1} parent=0 // pred_region
    _
  $region5: #{cwt4_conv_attention.1} parent=0 // pred_fallthru
    _
  // Predicated region
  $region6: #{cwt4_conv_attention.1} parent=0 // pred_check
    _
  $region7: #{cwt4_conv_attention.1} parent=0 // pred_check_branch
    %10 = sbr.rel (0) target = $region9
  $region8: #{cwt4_conv_attention.1} parent=0 // pred_region
    _
  $region9: #{cwt4_conv_attention.1} parent=0 // pred_fallthru
    _
  %v11 = vld [vmem:[%s0] sm:$0xff]
  %v12 = vld [vmem:[%s1 + $0x88] sm:$0xff]
  %v13 = vmul.f32 %v12, %v11
  %v14 = vld [vmem:[%s1 + $0xd0] sm:$0xff]
  %v15 = vmul.f32 %v14, %v11
  %v16 = vld [vmem:[%s1 + $0xf8] sm:$0xff]
  %v17 = vld [vmem:[%s1 + $0x100] sm:$0xff]
  %v18 = vld [vmem:[%s1 + $0x108] sm:$0xff]
  %v19 = vld [vmem:[%s1 + $0x110] sm:$0xff]
  %v20 = vld [vmem:[%s1 + $0x118] sm:$0xff]
  %v21 = vld [vmem:[%s1 + $0x120] sm:$0xff]
  %v22 = vld [vmem:[%s1 + $0x128] sm:$0xff]
  %v23 = vld [vmem:[%s1 + $0x130] sm:$0xff]
  %vm24 = vcmask 523264
  %v26 = vsel %vm24, %v11, 0
  %28 = vmatpush.msra.mxu0 0.0
  %29 = vmatpush.msra.mxu0 0.0
  %30 = vmatpush.msra.mxu0 0.0
  %31 = vmatpush.msra.mxu0 0.0
  %32 = vmatpush.msra.mxu0 0.0
  %33 = vmatpush.msra.mxu0 0.0
  %34 = vmatpush.msra.mxu0 0.0
  %35 = vmatpush.msra.mxu0 0.0
  %36 = vmatpush.msra.mxu0 %v23
  %37 = vmatpush.msra.mxu0 %v22
  %38 = vmatpush.msra.mxu0 %v21
  %39 = vmatpush.msra.mxu0 %v20
  %40 = vmatpush.msra.mxu0 %v19
  %41 = vmatpush.msra.mxu0 %v18
  %42 = vmatpush.msra.mxu0 %v17
  %43 = vmatpush.msra.mxu0 %v16
  %44 = vmatmul.f32.gmra.mxu0 %v26
  %v45 = vpop.f32.mrf.mxu0
  %v46 = vadd.f32 0.0, %v45
  %47 = vdwg.mxu0
  %v48 = vld [vmem:[%s1 + $0x68] sm:$0xff]
  %v49 = vmul.f32 %v48, %v46
  %v50 = vadd.f32 %v13, %v49
  %v51 = vld [vmem:[%s1 + $0xb0] sm:$0xff]
  %v52 = vmul.f32 %v51, %v46
  %v53 = vadd.f32 %v15, %v52
  %v54 = vld [vmem:[%s1 + $0x138] sm:$0xff]
  %v55 = vld [vmem:[%s1 + $0x140] sm:$0xff]
  %v56 = vld [vmem:[%s1 + $0x148] sm:$0xff]
  %v57 = vld [vmem:[%s1 + $0x150] sm:$0xff]
  %v58 = vld [vmem:[%s1 + $0x158] sm:$0xff]
  %v59 = vld [vmem:[%s1 + $0x160] sm:$0xff]
  %v60 = vld [vmem:[%s1 + $0x168] sm:$0xff]
  %v61 = vld [vmem:[%s1 + $0x170] sm:$0xff]
  %62 = vmatpush.msra.mxu0 0.0
  %63 = vmatpush.msra.mxu0 0.0
  %64 = vmatpush.msra.mxu0 0.0
  %65 = vmatpush.msra.mxu0 0.0
  %66 = vmatpush.msra.mxu0 0.0
  %67 = vmatpush.msra.mxu0 0.0
  %68 = vmatpush.msra.mxu0 0.0
  %69 = vmatpush.msra.mxu0 0.0
  %70 = vmatpush.msra.mxu0 %v61
  %71 = vmatpush.msra.mxu0 %v60
  %72 = vmatpush.msra.mxu0 %v59
  %73 = vmatpush.msra.mxu0 %v58
  %74 = vmatpush.msra.mxu0 %v57
  %75 = vmatpush.msra.mxu0 %v56
  %76 = vmatpush.msra.mxu0 %v55
  %77 = vmatpush.msra.mxu0 %v54
  %78 = vmatmul.f32.gmra.mxu0 %v26
  %v79 = vpop.f32.mrf.mxu0
  %v80 = vadd.f32 0.0, %v79
  %81 = vdwg.mxu0
  %v82 = vld [vmem:[%s1 + $0x70] sm:$0xff]
  %v83 = vmul.f32 %v82, %v80
  %v84 = vadd.f32 %v50, %v83
  %v85 = vld [vmem:[%s1 + $0xb8] sm:$0xff]
  %v86 = vmul.f32 %v85, %v80
  %v87 = vadd.f32 %v53, %v86
  %v88 = vld [vmem:[%s1 + $0x178] sm:$0xff]
  %v89 = vld [vmem:[%s1 + $0x180] sm:$0xff]
  %v90 = vld [vmem:[%s1 + $0x188] sm:$0xff]
  %v91 = vld [vmem:[%s1 + $0x190] sm:$0xff]
  %v92 = vld [vmem:[%s1 + $0x198] sm:$0xff]
  %v93 = vld [vmem:[%s1 + $0x1a0] sm:$0xff]
  %v94 = vld [vmem:[%s1 + $0x1a8] sm:$0xff]
  %v95 = vld [vmem:[%s1 + $0x1b0] sm:$0xff]
  %96 = vmatpush.msra.mxu0 0.0
  %97 = vmatpush.msra.mxu0 0.0
  %98 = vmatpush.msra.mxu0 0.0
  %99 = vmatpush.msra.mxu0 0.0
  %100 = vmatpush.msra.mxu0 0.0
  %101 = vmatpush.msra.mxu0 0.0
  %102 = vmatpush.msra.mxu0 0.0
  %103 = vmatpush.msra.mxu0 0.0
  %104 = vmatpush.msra.mxu0 %v95
  %105 = vmatpush.msra.mxu0 %v94
  %106 = vmatpush.msra.mxu0 %v93
  %107 = vmatpush.msra.mxu0 %v92
  %108 = vmatpush.msra.mxu0 %v91
  %109 = vmatpush.msra.mxu0 %v90
  %110 = vmatpush.msra.mxu0 %v89
  %111 = vmatpush.msra.mxu0 %v88
  %112 = vmatmul.f32.gmra.mxu0 %v26
  %v113 = vpop.f32.mrf.mxu0
  %v114 = vadd.f32 0.0, %v113
  %115 = vdwg.mxu0
  %v116 = vld [vmem:[%s1 + $0x78] sm:$0xff]
  %v117 = vmul.f32 %v116, %v114
  %v118 = vadd.f32 %v84, %v117
  %v119 = vld [vmem:[%s1 + $0xc0] sm:$0xff]
  %v120 = vmul.f32 %v119, %v114
  %v121 = vadd.f32 %v87, %v120
  %v122 = vld [vmem:[%s1 + $0x1b8] sm:$0xff]
  %v123 = vld [vmem:[%s1 + $0x1c0] sm:$0xff]
  %v124 = vld [vmem:[%s1 + $0x1c8] sm:$0xff]
  %v125 = vld [vmem:[%s1 + $0x1d0] sm:$0xff]
  %v126 = vld [vmem:[%s1 + $0x1d8] sm:$0xff]
  %v127 = vld [vmem:[%s1 + $0x1e0] sm:$0xff]
  %v128 = vld [vmem:[%s1 + $0x1e8] sm:$0xff]
  %v129 = vld [vmem:[%s1 + $0x1f0] sm:$0xff]
  %130 = vmatpush.msra.mxu0 0.0
  %131 = vmatpush.msra.mxu0 0.0
  %132 = vmatpush.msra.mxu0 0.0
  %133 = vmatpush.msra.mxu0 0.0
  %134 = vmatpush.msra.mxu0 0.0
  %135 = vmatpush.msra.mxu0 0.0
  %136 = vmatpush.msra.mxu0 0.0
  %137 = vmatpush.msra.mxu0 0.0
  %138 = vmatpush.msra.mxu0 %v129
  %139 = vmatpush.msra.mxu0 %v128
  %140 = vmatpush.msra.mxu0 %v127
  %141 = vmatpush.msra.mxu0 %v126
  %142 = vmatpush.msra.mxu0 %v125
  %143 = vmatpush.msra.mxu0 %v124
  %144 = vmatpush.msra.mxu0 %v123
  %145 = vmatpush.msra.mxu0 %v122
  %146 = vmatmul.f32.gmra.mxu0 %v26
  %v147 = vpop.f32.mrf.mxu0
  %v148 = vadd.f32 0.0, %v147
  %149 = vdwg.mxu0
  %v150 = vld [vmem:[%s1 + $0x80] sm:$0xff]
  %v151 = vmul.f32 %v150, %v148
  %v152 = vadd.f32 %v118, %v151
  %v153 = vld [vmem:[%s1 + $0xc8] sm:$0xff]
  %v154 = vmul.f32 %v153, %v148
  %v155 = vadd.f32 %v121, %v154
  %v156 = vld [vmem:[%s1 + $0x1f8] sm:$0xff]
  %v157 = vld [vmem:[%s1 + $0x200] sm:$0xff]
  %v158 = vld [vmem:[%s1 + $0x208] sm:$0xff]
  %v159 = vld [vmem:[%s1 + $0x210] sm:$0xff]
  %v160 = vld [vmem:[%s1 + $0x218] sm:$0xff]
  %v161 = vld [vmem:[%s1 + $0x220] sm:$0xff]
  %v162 = vld [vmem:[%s1 + $0x228] sm:$0xff]
  %v163 = vld [vmem:[%s1 + $0x230] sm:$0xff]
  %164 = vmatpush.msra.mxu0 0.0
  %165 = vmatpush.msra.mxu0 0.0
  %166 = vmatpush.msra.mxu0 0.0
  %167 = vmatpush.msra.mxu0 0.0
  %168 = vmatpush.msra.mxu0 0.0
  %169 = vmatpush.msra.mxu0 0.0
  %170 = vmatpush.msra.mxu0 0.0
  %171 = vmatpush.msra.mxu0 0.0
  %172 = vmatpush.msra.mxu0 %v163
  %173 = vmatpush.msra.mxu0 %v162
  %174 = vmatpush.msra.mxu0 %v161
  %175 = vmatpush.msra.mxu0 %v160
  %176 = vmatpush.msra.mxu0 %v159
  %177 = vmatpush.msra.mxu0 %v158
  %178 = vmatpush.msra.mxu0 %v157
  %179 = vmatpush.msra.mxu0 %v156
  %180 = vmatmul.f32.gmra.mxu0 %v26
  %v181 = vpop.f32.mrf.mxu0
  %v182 = vadd.f32 0.0, %v181
  %183 = vdwg.mxu0
  %v184 = vld [vmem:[%s1 + $0x90] sm:$0xff]
  %v185 = vmul.f32 %v184, %v182
  %v186 = vadd.f32 %v152, %v185
  %v187 = vld [vmem:[%s1 + $0xd8] sm:$0xff]
  %v188 = vmul.f32 %v187, %v182
  %v189 = vadd.f32 %v155, %v188
  %v190 = vld [vmem:[%s1 + $0x238] sm:$0xff]
  %v191 = vld [vmem:[%s1 + $0x240] sm:$0xff]
  %v192 = vld [vmem:[%s1 + $0x248] sm:$0xff]
  %v193 = vld [vmem:[%s1 + $0x250] sm:$0xff]
  %v194 = vld [vmem:[%s1 + $0x258] sm:$0xff]
  %v195 = vld [vmem:[%s1 + $0x260] sm:$0xff]
  %v196 = vld [vmem:[%s1 + $0x268] sm:$0xff]
  %v197 = vld [vmem:[%s1 + $0x270] sm:$0xff]
  %198 = vmatpush.msra.mxu0 0.0
  %199 = vmatpush.msra.mxu0 0.0
  %200 = vmatpush.msra.mxu0 0.0
  %201 = vmatpush.msra.mxu0 0.0
  %202 = vmatpush.msra.mxu0 0.0
  %203 = vmatpush.msra.mxu0 0.0
  %204 = vmatpush.msra.mxu0 0.0
  %205 = vmatpush.msra.mxu0 0.0
  %206 = vmatpush.msra.mxu0 %v197
  %207 = vmatpush.msra.mxu0 %v196
  %208 = vmatpush.msra.mxu0 %v195
  %209 = vmatpush.msra.mxu0 %v194
  %210 = vmatpush.msra.mxu0 %v193
  %211 = vmatpush.msra.mxu0 %v192
  %212 = vmatpush.msra.mxu0 %v191
  %213 = vmatpush.msra.mxu0 %v190
  %214 = vmatmul.f32.gmra.mxu0 %v26
  %v215 = vpop.f32.mrf.mxu0
  %v216 = vadd.f32 0.0, %v215
  %217 = vdwg.mxu0
  %v218 = vld [vmem:[%s1 + $0x98] sm:$0xff]
  %v219 = vmul.f32 %v218, %v216
  %v220 = vadd.f32 %v186, %v219
  %v221 = vld [vmem:[%s1 + $0xe0] sm:$0xff]
  %v222 = vmul.f32 %v221, %v216
  %v223 = vadd.f32 %v189, %v222
  %v224 = vld [vmem:[%s1 + $0x278] sm:$0xff]
  %v225 = vld [vmem:[%s1 + $0x280] sm:$0xff]
  %v226 = vld [vmem:[%s1 + $0x288] sm:$0xff]
  %v227 = vld [vmem:[%s1 + $0x290] sm:$0xff]
  %v228 = vld [vmem:[%s1 + $0x298] sm:$0xff]
  %v229 = vld [vmem:[%s1 + $0x2a0] sm:$0xff]
  %v230 = vld [vmem:[%s1 + $0x2a8] sm:$0xff]
  %v231 = vld [vmem:[%s1 + $0x2b0] sm:$0xff]
  %232 = vmatpush.msra.mxu0 0.0
  %233 = vmatpush.msra.mxu0 0.0
  %234 = vmatpush.msra.mxu0 0.0
  %235 = vmatpush.msra.mxu0 0.0
  %236 = vmatpush.msra.mxu0 0.0
  %237 = vmatpush.msra.mxu0 0.0
  %238 = vmatpush.msra.mxu0 0.0
  %239 = vmatpush.msra.mxu0 0.0
  %240 = vmatpush.msra.mxu0 %v231
  %241 = vmatpush.msra.mxu0 %v230
  %242 = vmatpush.msra.mxu0 %v229
  %243 = vmatpush.msra.mxu0 %v228
  %244 = vmatpush.msra.mxu0 %v227
  %245 = vmatpush.msra.mxu0 %v226
  %246 = vmatpush.msra.mxu0 %v225
  %247 = vmatpush.msra.mxu0 %v224
  %248 = vmatmul.f32.gmra.mxu0 %v26
  %v249 = vpop.f32.mrf.mxu0
  %v250 = vadd.f32 0.0, %v249
  %251 = vdwg.mxu0
  %v252 = vld [vmem:[%s1 + $0xa0] sm:$0xff]
  %v253 = vmul.f32 %v252, %v250
  %v254 = vadd.f32 %v220, %v253
  %v255 = vld [vmem:[%s1 + $0xe8] sm:$0xff]
  %v256 = vmul.f32 %v255, %v250
  %v257 = vadd.f32 %v223, %v256
  %v258 = vld [vmem:[%s1 + $0x2b8] sm:$0xff]
  %v259 = vld [vmem:[%s1 + $0x2c0] sm:$0xff]
  %v260 = vld [vmem:[%s1 + $0x2c8] sm:$0xff]
  %v261 = vld [vmem:[%s1 + $0x2d0] sm:$0xff]
  %v262 = vld [vmem:[%s1 + $0x2d8] sm:$0xff]
  %v263 = vld [vmem:[%s1 + $0x2e0] sm:$0xff]
  %v264 = vld [vmem:[%s1 + $0x2e8] sm:$0xff]
  %v265 = vld [vmem:[%s1 + $0x2f0] sm:$0xff]
  %266 = vmatpush.msra.mxu0 0.0
  %267 = vmatpush.msra.mxu0 0.0
  %268 = vmatpush.msra.mxu0 0.0
  %269 = vmatpush.msra.mxu0 0.0
  %270 = vmatpush.msra.mxu0 0.0
  %271 = vmatpush.msra.mxu0 0.0
  %272 = vmatpush.msra.mxu0 0.0
  %273 = vmatpush.msra.mxu0 0.0
  %274 = vmatpush.msra.mxu0 %v265
  %275 = vmatpush.msra.mxu0 %v264
  %276 = vmatpush.msra.mxu0 %v263
  %277 = vmatpush.msra.mxu0 %v262
  %278 = vmatpush.msra.mxu0 %v261
  %279 = vmatpush.msra.mxu0 %v260
  %280 = vmatpush.msra.mxu0 %v259
  %281 = vmatpush.msra.mxu0 %v258
  %282 = vmatmul.f32.gmra.mxu0 %v26
  %v283 = vpop.f32.mrf.mxu0
  %v284 = vadd.f32 0.0, %v283
  %285 = vdwg.mxu0
  %v286 = vld [vmem:[%s1 + $0xa8] sm:$0xff]
  %v287 = vmul.f32 %v286, %v284
  %v288 = vadd.f32 %v254, %v287
  %v289 = vld [vmem:[%s1 + $0xf0] sm:$0xff]
  %v290 = vmul.f32 %v289, %v284
  %v291 = vadd.f32 %v257, %v290
  %v292 = vld [vmem:[%s1] sm:$0xff]
  %v293 = vld [vmem:[%s1 + $0x8] sm:$0xff]
  %v294 = vld [vmem:[%s1 + $0x10] sm:$0xff]
  %298 = vrot.lane.b32.xlu0 %v292, 120
  %v299 = vpop.permute.xlu0 %298
  %300 = vrot.lane.b32.xlu0 %v293, 120
  %v301 = vpop.permute.xlu0 %300
  %302 = vrot.lane.b32.xlu0 %v294, 120
  %v303 = vpop.permute.xlu0 %302
  %vm304 = vcmask 64512
  %v305 = vsel %vm304, %v299, 0
  %v307 = vsel %vm304, %v301, 0
  %v309 = vsel %vm304, %v303, 0
  %311 = vmatpush.msra.mxu0 0.0
  %312 = vmatpush.msra.mxu0 0.0
  %313 = vmatpush.msra.mxu0 0.0
  %314 = vmatpush.msra.mxu0 0.0
  %315 = vmatpush.msra.mxu0 0.0
  %316 = vmatpush.msra.mxu0 0.0
  %317 = vmatpush.msra.mxu0 0.0
  %318 = vmatpush.msra.mxu0 0.0
  %319 = vmatpush.msra.mxu0 0.0
  %320 = vmatpush.msra.mxu0 0.0
  %321 = vmatpush.msra.mxu0 0.0
  %322 = vmatpush.msra.mxu0 0.0
  %323 = vmatpush.msra.mxu0 0.0
  %324 = vmatpush.msra.mxu0 0.0
  %325 = vmatpush.msra.mxu0 0.0
  %326 = vmatpush.msra.mxu0 %v291
  %327 = vmatmul.f32.gmra.mxu0 %v305
  %v328 = vpop.f32.mrf.mxu0
  %v329 = vadd.f32 0.0, %v328
  %330 = vmatmul.f32.gmra.mxu0 %v307
  %v331 = vpop.f32.mrf.mxu0
  %v332 = vadd.f32 0.0, %v331
  %333 = vmatmul.f32.gmra.mxu0 %v309
  %v334 = vpop.f32.mrf.mxu0
  %v335 = vadd.f32 0.0, %v334
  %336 = vdwg.mxu0
  %v337 = vsel %vm304, %v292, 0
  %v339 = vsel %vm304, %v293, 0
  %v341 = vsel %vm304, %v294, 0
  %343 = vmatpush.msra.mxu0 0.0
  %344 = vmatpush.msra.mxu0 0.0
  %345 = vmatpush.msra.mxu0 0.0
  %346 = vmatpush.msra.mxu0 0.0
  %347 = vmatpush.msra.mxu0 0.0
  %348 = vmatpush.msra.mxu0 0.0
  %349 = vmatpush.msra.mxu0 0.0
  %350 = vmatpush.msra.mxu0 0.0
  %351 = vmatpush.msra.mxu0 0.0
  %352 = vmatpush.msra.mxu0 0.0
  %353 = vmatpush.msra.mxu0 0.0
  %354 = vmatpush.msra.mxu0 0.0
  %355 = vmatpush.msra.mxu0 0.0
  %356 = vmatpush.msra.mxu0 0.0
  %357 = vmatpush.msra.mxu0 0.0
  %358 = vmatpush.msra.mxu0 %v288
  %359 = vmatmul.f32.gmra.mxu0 %v337
  %v360 = vpop.f32.mrf.mxu0
  %v361 = vadd.f32 %v329, %v360
  %362 = vmatmul.f32.gmra.mxu0 %v339
  %v363 = vpop.f32.mrf.mxu0
  %v364 = vadd.f32 %v332, %v363
  %365 = vmatmul.f32.gmra.mxu0 %v341
  %v366 = vpop.f32.mrf.mxu0
  %v367 = vadd.f32 %v335, %v366
  %368 = vdwg.mxu0
  %369 = vset.pattern.permute.xlu0 16
  %370 = vperm.xlu0 %369, %v292
  %v371 = vpop.permute.xlu0 %370
  %373 = vset.pattern.permute.xlu0 16
  %374 = vperm.xlu0 %373, %v293
  %v375 = vpop.permute.xlu0 %374
  %377 = vset.pattern.permute.xlu0 16
  %378 = vperm.xlu0 %377, %v294
  %v379 = vpop.permute.xlu0 %378
  %v381 = vadd.f32 %v361, %v371
  %v382 = vadd.f32 %v364, %v375
  %v383 = vadd.f32 %v367, %v379
  %v384 = vld [vmem:[%s1 + $0x28] sm:$0xff]
  %v385 = vld [vmem:[%s1 + $0x30] sm:$0xff]
  %v386 = vld [vmem:[%s1 + $0x38] sm:$0xff]
  %v387 = vld [vmem:[%s1 + $0x40] sm:$0xff]
  %v388 = vld [vmem:[%s1 + $0x48] sm:$0xff]
  %v389 = vld [vmem:[%s1 + $0x50] sm:$0xff]
  %v390 = vld [vmem:[%s1 + $0x58] sm:$0xff]
  %v391 = vld [vmem:[%s1 + $0x60] sm:$0xff]
  %v392 = vld [vmem:[%s1 + $0x18] sm:$0xff]
  %v393 = vld [vmem:[%s1 + $0x20] sm:$0xff]
  %v395 = vsel %vm24, %v382, 0
  %v398 = vsel %vm24, %v383, 0
  %400 = vmatpush.msra.mxu0 0.0
  %401 = vmatpush.msra.mxu0 0.0
  %402 = vmatpush.msra.mxu0 0.0
  %403 = vmatpush.msra.mxu0 0.0
  %404 = vmatpush.msra.mxu0 0.0
  %405 = vmatpush.msra.mxu0 0.0
  %406 = vmatpush.msra.mxu0 0.0
  %407 = vmatpush.msra.mxu0 0.0
  %408 = vmatpush.msra.mxu0 %v391
  %409 = vmatpush.msra.mxu0 %v390
  %410 = vmatpush.msra.mxu0 %v389
  %411 = vmatpush.msra.mxu0 %v388
  %412 = vmatpush.msra.mxu0 %v387
  %413 = vmatpush.msra.mxu0 %v386
  %414 = vmatpush.msra.mxu0 %v385
  %415 = vmatpush.msra.mxu0 %v384
  %416 = vmatmul.f32.gmra.mxu0 %v395
  %v417 = vpop.f32.mrf.mxu0
  %v418 = vadd.f32 %v392, %v417
  %419 = vmatmul.f32.gmra.mxu0 %v398
  %v420 = vpop.f32.mrf.mxu0
  %v421 = vadd.f32 %v393, %v420
  %422 = vdwg.mxu0
  %v423 = vperm.slane %v418, 0
  %v424 = vlaneseq
  %v425 = vshrl.u32 %v424, 7
  %427 = vset.pattern.permute.xlu0 %v425
  %428 = vperm.xlu0 %427, %v423
  %v429 = vpop.permute.xlu0 %428
  %v430 = vperm.slane %v418, 1
  %v431 = vlaneseq
  %v432 = vshrl.u32 %v431, 7
  %434 = vset.pattern.permute.xlu0 %v432
  %435 = vperm.xlu0 %434, %v430
  %v436 = vpop.permute.xlu0 %435
  %v437 = vperm.slane %v418, 2
  %v438 = vlaneseq
  %v439 = vshrl.u32 %v438, 7
  %441 = vset.pattern.permute.xlu0 %v439
  %442 = vperm.xlu0 %441, %v437
  %v443 = vpop.permute.xlu0 %442
  %v444 = vperm.slane %v418, 3
  %v445 = vlaneseq
  %v446 = vshrl.u32 %v445, 7
  %448 = vset.pattern.permute.xlu0 %v446
  %449 = vperm.xlu0 %448, %v444
  %v450 = vpop.permute.xlu0 %449
  %v451 = vperm.slane %v418, 4
  %v452 = vlaneseq
  %v453 = vshrl.u32 %v452, 7
  %455 = vset.pattern.permute.xlu0 %v453
  %456 = vperm.xlu0 %455, %v451
  %v457 = vpop.permute.xlu0 %456
  %v458 = vperm.slane %v418, 5
  %v459 = vlaneseq
  %v460 = vshrl.u32 %v459, 7
  %462 = vset.pattern.permute.xlu0 %v460
  %463 = vperm.xlu0 %462, %v458
  %v464 = vpop.permute.xlu0 %463
  %v465 = vperm.slane %v418, 6
  %v466 = vlaneseq
  %v467 = vshrl.u32 %v466, 7
  %469 = vset.pattern.permute.xlu0 %v467
  %470 = vperm.xlu0 %469, %v465
  %v471 = vpop.permute.xlu0 %470
  %v472 = vperm.slane %v418, 7
  %v473 = vlaneseq
  %v474 = vshrl.u32 %v473, 7
  %476 = vset.pattern.permute.xlu0 %v474
  %477 = vperm.xlu0 %476, %v472
  %v478 = vpop.permute.xlu0 %477
  %v480 = vrot.slane %v421, 1
  %v481 = vrot.slane %v421, 2
  %v482 = vrot.slane %v421, 3
  %v483 = vrot.slane %v421, 4
  %v484 = vrot.slane %v421, 5
  %v485 = vrot.slane %v421, 6
  %v486 = vrot.slane %v421, 7
  %v487 = vperm.slane %v421, 0
  %v488 = vperm.slane %v480, 0
  %v489 = vperm.slane %v481, 0
  %v490 = vperm.slane %v482, 0
  %v491 = vperm.slane %v483, 0
  %v492 = vperm.slane %v484, 0
  %v493 = vperm.slane %v485, 0
  %v494 = vperm.slane %v486, 0
  %v503 = vmul.f32 %v429, %v487
  %v504 = vmul.f32 %v436, %v488
  %v505 = vmul.f32 %v443, %v489
  %v506 = vmul.f32 %v450, %v490
  %v507 = vmul.f32 %v457, %v491
  %v508 = vmul.f32 %v464, %v492
  %v509 = vmul.f32 %v471, %v493
  %v510 = vmul.f32 %v478, %v494
  %vm511 = vcmask 130112
  %v512 = vsel %vm511, %v503, -inf
  %513 = vmax.xlane.f32.xlu0 %v512
  %v514 = vpop.xlane.xlu0 %513
  %v515 = vsel %vm511, %v504, -inf
  %516 = vmax.xlane.f32.xlu0 %v515
  %v517 = vpop.xlane.xlu0 %516
  %v518 = vsel %vm511, %v505, -inf
  %519 = vmax.xlane.f32.xlu0 %v518
  %v520 = vpop.xlane.xlu0 %519
  %v521 = vsel %vm511, %v506, -inf
  %522 = vmax.xlane.f32.xlu0 %v521
  %v523 = vpop.xlane.xlu0 %522
  %v524 = vsel %vm511, %v507, -inf
  %525 = vmax.xlane.f32.xlu0 %v524
  %v526 = vpop.xlane.xlu0 %525
  %v527 = vsel %vm511, %v508, -inf
  %528 = vmax.xlane.f32.xlu0 %v527
  %v529 = vpop.xlane.xlu0 %528
  %v530 = vsel %vm511, %v509, -inf
  %531 = vmax.xlane.f32.xlu0 %v530
  %v532 = vpop.xlane.xlu0 %531
  %v533 = vsel %vm511, %v510, -inf
  %534 = vmax.xlane.f32.xlu0 %v533
  %v535 = vpop.xlane.xlu0 %534
  %v536 = vsub.f32 %v503, %v514
  %v537 = vsub.f32 %v504, %v517
  %v538 = vsub.f32 %v505, %v520
  %v539 = vsub.f32 %v506, %v523
  %v540 = vsub.f32 %v507, %v526
  %v541 = vsub.f32 %v508, %v529
  %v542 = vsub.f32 %v509, %v532
  %v543 = vsub.f32 %v510, %v535
  %v544 = vmul.f32 %v536, 1.442695
  %v545 = vpow.pop %v544
  %v546 = vmul.f32 %v537, 1.442695
  %v547 = vpow.pop %v546
  %v548 = vmul.f32 %v538, 1.442695
  %v549 = vpow.pop %v548
  %v550 = vmul.f32 %v539, 1.442695
  %v551 = vpow.pop %v550
  %v552 = vmul.f32 %v540, 1.442695
  %v553 = vpow.pop %v552
  %v554 = vmul.f32 %v541, 1.442695
  %v555 = vpow.pop %v554
  %v556 = vmul.f32 %v542, 1.442695
  %v557 = vpow.pop %v556
  %v558 = vmul.f32 %v543, 1.442695
  %v559 = vpow.pop %v558
  %568 = vrot.lane.b32.xlu0 %v545, 120
  %v569 = vpop.permute.xlu0 %568
  %570 = vrot.lane.b32.xlu0 %v547, 120
  %v571 = vpop.permute.xlu0 %570
  %572 = vrot.lane.b32.xlu0 %v549, 120
  %v573 = vpop.permute.xlu0 %572
  %574 = vrot.lane.b32.xlu0 %v551, 120
  %v575 = vpop.permute.xlu0 %574
  %576 = vrot.lane.b32.xlu0 %v553, 120
  %v577 = vpop.permute.xlu0 %576
  %578 = vrot.lane.b32.xlu0 %v555, 120
  %v579 = vpop.permute.xlu0 %578
  %580 = vrot.lane.b32.xlu0 %v557, 120
  %v581 = vpop.permute.xlu0 %580
  %582 = vrot.lane.b32.xlu0 %v559, 120
  %v583 = vpop.permute.xlu0 %582
  %v592 = vsel %vm304, %v569, 0.0
  %593 = vadd.xlane.f32.xlu0 %v592
  %v594 = vpop.xlane.xlu0 %593
  %v595 = vsel %vm304, %v571, 0.0
  %596 = vadd.xlane.f32.xlu0 %v595
  %v597 = vpop.xlane.xlu0 %596
  %v598 = vsel %vm304, %v573, 0.0
  %599 = vadd.xlane.f32.xlu0 %v598
  %v600 = vpop.xlane.xlu0 %599
  %v601 = vsel %vm304, %v575, 0.0
  %602 = vadd.xlane.f32.xlu0 %v601
  %v603 = vpop.xlane.xlu0 %602
  %v604 = vsel %vm304, %v577, 0.0
  %605 = vadd.xlane.f32.xlu0 %v604
  %v606 = vpop.xlane.xlu0 %605
  %v607 = vsel %vm304, %v579, 0.0
  %608 = vadd.xlane.f32.xlu0 %v607
  %v609 = vpop.xlane.xlu0 %608
  %v610 = vsel %vm304, %v581, 0.0
  %611 = vadd.xlane.f32.xlu0 %v610
  %v612 = vpop.xlane.xlu0 %611
  %v613 = vsel %vm304, %v583, 0.0
  %614 = vadd.xlane.f32.xlu0 %v613
  %v615 = vpop.xlane.xlu0 %614
  %v616 = vrcp.pop %v594
  %v617 = vrcp.pop %v597
  %v618 = vrcp.pop %v600
  %v619 = vrcp.pop %v603
  %v620 = vrcp.pop %v606
  %v621 = vrcp.pop %v609
  %v622 = vrcp.pop %v612
  %v623 = vrcp.pop %v615
  %v624 = vmul.f32 %v545, %v616
  %v625 = vmul.f32 %v547, %v617
  %v626 = vmul.f32 %v549, %v618
  %v627 = vmul.f32 %v551, %v619
  %v628 = vmul.f32 %v553, %v620
  %v629 = vmul.f32 %v555, %v621
  %v630 = vmul.f32 %v557, %v622
  %v631 = vmul.f32 %v559, %v623
  %633 = vrot.lane.b32.xlu0 %v381, 120
  %v634 = vpop.permute.xlu0 %633
  %636 = vrot.lane.b32.xlu0 %v381, 112
  %v637 = vpop.permute.xlu0 %636
  %639 = vrot.lane.b32.xlu0 %v381, 104
  %v640 = vpop.permute.xlu0 %639
  %642 = vrot.lane.b32.xlu0 %v381, 96
  %v643 = vpop.permute.xlu0 %642
  %645 = vrot.lane.b32.xlu0 %v381, 88
  %v646 = vpop.permute.xlu0 %645
  %648 = vrot.lane.b32.xlu0 %v381, 80
  %v649 = vpop.permute.xlu0 %648
  %651 = vrot.lane.b32.xlu0 %v381, 72
  %v652 = vpop.permute.xlu0 %651
  %v654 = vrot.slane %v637, 4
  %vm655 = vcmask 1047556
  %v656 = vsel %vm655, %v654, %v381
  %v657 = vrot.slane %v381, 4
  %v658 = vsel %vm655, %v637, %v657
  %v660 = vunpack.c.l.s4 1983009808
  %v661 = vunpack.c.0.s8 %v660
  %v662 = vperm.slane %v656, %v661
  %v664 = vunpack.c.l.s4 1983009808
  %v665 = vunpack.c.0.s8 %v664
  %v666 = vperm.slane %v658, %v665
  %v667 = vrot.slane %v640, 4
  %v668 = vsel %vm655, %v667, %v634
  %v669 = vrot.slane %v634, 4
  %v670 = vsel %vm655, %v640, %v669
  %v672 = vunpack.c.l.s4 1983009808
  %v673 = vunpack.c.0.s8 %v672
  %v674 = vperm.slane %v668, %v673
  %v676 = vunpack.c.l.s4 1983009808
  %v677 = vunpack.c.0.s8 %v676
  %v678 = vperm.slane %v670, %v677
  %v679 = vrot.slane %v649, 4
  %v680 = vsel %vm655, %v679, %v643
  %v681 = vrot.slane %v643, 4
  %v682 = vsel %vm655, %v649, %v681
  %v684 = vunpack.c.l.s4 1983009808
  %v685 = vunpack.c.0.s8 %v684
  %v686 = vperm.slane %v680, %v685
  %v688 = vunpack.c.l.s4 1983009808
  %v689 = vunpack.c.0.s8 %v688
  %v690 = vperm.slane %v682, %v689
  %v691 = vrot.slane %v652, 4
  %v692 = vsel %vm655, %v691, %v646
  %v693 = vrot.slane %v646, 4
  %v694 = vsel %vm655, %v652, %v693
  %v696 = vunpack.c.l.s4 1983009808
  %v697 = vunpack.c.0.s8 %v696
  %v698 = vperm.slane %v692, %v697
  %v700 = vunpack.c.l.s4 1983009808
  %v701 = vunpack.c.0.s8 %v700
  %v702 = vperm.slane %v694, %v701
  %v703 = vrot.slane %v674, 4
  %v704 = vsel %vm655, %v703, %v662
  %v705 = vrot.slane %v662, 4
  %v706 = vsel %vm655, %v674, %v705
  %v708 = vunpack.c.l.s4 1934713408
  %v709 = vunpack.c.0.s8 %v708
  %v710 = vperm.slane %v704, %v709
  %v712 = vunpack.c.l.s4 1934713408
  %v713 = vunpack.c.0.s8 %v712
  %v714 = vperm.slane %v706, %v713
  %v715 = vrot.slane %v678, 4
  %v716 = vsel %vm655, %v715, %v666
  %v717 = vrot.slane %v666, 4
  %v718 = vsel %vm655, %v678, %v717
  %v720 = vunpack.c.l.s4 1934713408
  %v721 = vunpack.c.0.s8 %v720
  %v722 = vperm.slane %v716, %v721
  %v724 = vunpack.c.l.s4 1934713408
  %v725 = vunpack.c.0.s8 %v724
  %v726 = vperm.slane %v718, %v725
  %v727 = vrot.slane %v698, 4
  %v728 = vsel %vm655, %v727, %v686
  %v729 = vrot.slane %v686, 4
  %v730 = vsel %vm655, %v698, %v729
  %v732 = vunpack.c.l.s4 1934713408
  %v733 = vunpack.c.0.s8 %v732
  %v734 = vperm.slane %v728, %v733
  %v736 = vunpack.c.l.s4 1934713408
  %v737 = vunpack.c.0.s8 %v736
  %v738 = vperm.slane %v730, %v737
  %v739 = vrot.slane %v702, 4
  %v740 = vsel %vm655, %v739, %v690
  %v741 = vrot.slane %v690, 4
  %v742 = vsel %vm655, %v702, %v741
  %v744 = vunpack.c.l.s4 1934713408
  %v745 = vunpack.c.0.s8 %v744
  %v746 = vperm.slane %v740, %v745
  %v748 = vunpack.c.l.s4 1934713408
  %v749 = vunpack.c.0.s8 %v748
  %v750 = vperm.slane %v742, %v749
  %v751 = vrot.slane %v734, 4
  %v752 = vsel %vm655, %v751, %v710
  %v753 = vrot.slane %v710, 4
  %v754 = vsel %vm655, %v734, %v753
  %v755 = vrot.slane %v738, 4
  %v756 = vsel %vm655, %v755, %v714
  %v757 = vrot.slane %v714, 4
  %v758 = vsel %vm655, %v738, %v757
  %v759 = vrot.slane %v746, 4
  %v760 = vsel %vm655, %v759, %v722
  %v761 = vrot.slane %v722, 4
  %v762 = vsel %vm655, %v746, %v761
  %v763 = vrot.slane %v750, 4
  %v764 = vsel %vm655, %v763, %v726
  %v765 = vrot.slane %v726, 4
  %v766 = vsel %vm655, %v750, %v765
  %768 = vrot.lane.b32.xlu0 %v624, 120
  %v769 = vpop.permute.xlu0 %768
  %v770 = vsel %vm304, %v769, 0
  %772 = vmatpush.msra.mxu0 0.0
  %773 = vmatpush.msra.mxu0 0.0
  %774 = vmatpush.msra.mxu0 0.0
  %775 = vmatpush.msra.mxu0 0.0
  %776 = vmatpush.msra.mxu0 0.0
  %777 = vmatpush.msra.mxu0 0.0
  %778 = vmatpush.msra.mxu0 0.0
  %779 = vmatpush.msra.mxu0 0.0
  %780 = vmatpush.msra.mxu0 0.0
  %781 = vmatpush.msra.mxu0 0.0
  %782 = vmatpush.msra.mxu0 0.0
  %783 = vmatpush.msra.mxu0 0.0
  %784 = vmatpush.msra.mxu0 0.0
  %785 = vmatpush.msra.mxu0 0.0
  %786 = vmatpush.msra.mxu0 0.0
  %787 = vmatpush.msra.mxu0 %v752
  %788 = vmatmul.f32.gmra.mxu0 %v770
  %v789 = vpop.f32.mrf.mxu0
  %v790 = vadd.f32 0.0, %v789
  %791 = vdwg.mxu0
  %793 = vrot.lane.b32.xlu0 %v625, 120
  %v794 = vpop.permute.xlu0 %793
  %v795 = vsel %vm304, %v794, 0
  %797 = vmatpush.msra.mxu0 0.0
  %798 = vmatpush.msra.mxu0 0.0
  %799 = vmatpush.msra.mxu0 0.0
  %800 = vmatpush.msra.mxu0 0.0
  %801 = vmatpush.msra.mxu0 0.0
  %802 = vmatpush.msra.mxu0 0.0
  %803 = vmatpush.msra.mxu0 0.0
  %804 = vmatpush.msra.mxu0 0.0
  %805 = vmatpush.msra.mxu0 0.0
  %806 = vmatpush.msra.mxu0 0.0
  %807 = vmatpush.msra.mxu0 0.0
  %808 = vmatpush.msra.mxu0 0.0
  %809 = vmatpush.msra.mxu0 0.0
  %810 = vmatpush.msra.mxu0 0.0
  %811 = vmatpush.msra.mxu0 0.0
  %812 = vmatpush.msra.mxu0 %v754
  %813 = vmatmul.f32.gmra.mxu0 %v795
  %v814 = vpop.f32.mrf.mxu0
  %v815 = vadd.f32 0.0, %v814
  %816 = vdwg.mxu0
  %818 = vrot.lane.b32.xlu0 %v626, 120
  %v819 = vpop.permute.xlu0 %818
  %v820 = vsel %vm304, %v819, 0
  %822 = vmatpush.msra.mxu0 0.0
  %823 = vmatpush.msra.mxu0 0.0
  %824 = vmatpush.msra.mxu0 0.0
  %825 = vmatpush.msra.mxu0 0.0
  %826 = vmatpush.msra.mxu0 0.0
  %827 = vmatpush.msra.mxu0 0.0
  %828 = vmatpush.msra.mxu0 0.0
  %829 = vmatpush.msra.mxu0 0.0
  %830 = vmatpush.msra.mxu0 0.0
  %831 = vmatpush.msra.mxu0 0.0
  %832 = vmatpush.msra.mxu0 0.0
  %833 = vmatpush.msra.mxu0 0.0
  %834 = vmatpush.msra.mxu0 0.0
  %835 = vmatpush.msra.mxu0 0.0
  %836 = vmatpush.msra.mxu0 0.0
  %837 = vmatpush.msra.mxu0 %v756
  %838 = vmatmul.f32.gmra.mxu0 %v820
  %v839 = vpop.f32.mrf.mxu0
  %v840 = vadd.f32 0.0, %v839
  %841 = vdwg.mxu0
  %843 = vrot.lane.b32.xlu0 %v627, 120
  %v844 = vpop.permute.xlu0 %843
  %v845 = vsel %vm304, %v844, 0
  %847 = vmatpush.msra.mxu0 0.0
  %848 = vmatpush.msra.mxu0 0.0
  %849 = vmatpush.msra.mxu0 0.0
  %850 = vmatpush.msra.mxu0 0.0
  %851 = vmatpush.msra.mxu0 0.0
  %852 = vmatpush.msra.mxu0 0.0
  %853 = vmatpush.msra.mxu0 0.0
  %854 = vmatpush.msra.mxu0 0.0
  %855 = vmatpush.msra.mxu0 0.0
  %856 = vmatpush.msra.mxu0 0.0
  %857 = vmatpush.msra.mxu0 0.0
  %858 = vmatpush.msra.mxu0 0.0
  %859 = vmatpush.msra.mxu0 0.0
  %860 = vmatpush.msra.mxu0 0.0
  %861 = vmatpush.msra.mxu0 0.0
  %862 = vmatpush.msra.mxu0 %v758
  %863 = vmatmul.f32.gmra.mxu0 %v845
  %v864 = vpop.f32.mrf.mxu0
  %v865 = vadd.f32 0.0, %v864
  %866 = vdwg.mxu0
  %868 = vrot.lane.b32.xlu0 %v628, 120
  %v869 = vpop.permute.xlu0 %868
  %v870 = vsel %vm304, %v869, 0
  %872 = vmatpush.msra.mxu0 0.0
  %873 = vmatpush.msra.mxu0 0.0
  %874 = vmatpush.msra.mxu0 0.0
  %875 = vmatpush.msra.mxu0 0.0
  %876 = vmatpush.msra.mxu0 0.0
  %877 = vmatpush.msra.mxu0 0.0
  %878 = vmatpush.msra.mxu0 0.0
  %879 = vmatpush.msra.mxu0 0.0
  %880 = vmatpush.msra.mxu0 0.0
  %881 = vmatpush.msra.mxu0 0.0
  %882 = vmatpush.msra.mxu0 0.0
  %883 = vmatpush.msra.mxu0 0.0
  %884 = vmatpush.msra.mxu0 0.0
  %885 = vmatpush.msra.mxu0 0.0
  %886 = vmatpush.msra.mxu0 0.0
  %887 = vmatpush.msra.mxu0 %v760
  %888 = vmatmul.f32.gmra.mxu0 %v870
  %v889 = vpop.f32.mrf.mxu0
  %v890 = vadd.f32 0.0, %v889
  %891 = vdwg.mxu0
  %893 = vrot.lane.b32.xlu0 %v629, 120
  %v894 = vpop.permute.xlu0 %893
  %v895 = vsel %vm304, %v894, 0
  %897 = vmatpush.msra.mxu0 0.0
  %898 = vmatpush.msra.mxu0 0.0
  %899 = vmatpush.msra.mxu0 0.0
  %900 = vmatpush.msra.mxu0 0.0
  %901 = vmatpush.msra.mxu0 0.0
  %902 = vmatpush.msra.mxu0 0.0
  %903 = vmatpush.msra.mxu0 0.0
  %904 = vmatpush.msra.mxu0 0.0
  %905 = vmatpush.msra.mxu0 0.0
  %906 = vmatpush.msra.mxu0 0.0
  %907 = vmatpush.msra.mxu0 0.0
  %908 = vmatpush.msra.mxu0 0.0
  %909 = vmatpush.msra.mxu0 0.0
  %910 = vmatpush.msra.mxu0 0.0
  %911 = vmatpush.msra.mxu0 0.0
  %912 = vmatpush.msra.mxu0 %v762
  %913 = vmatmul.f32.gmra.mxu0 %v895
  %v914 = vpop.f32.mrf.mxu0
  %v915 = vadd.f32 0.0, %v914
  %916 = vdwg.mxu0
  %918 = vrot.lane.b32.xlu0 %v630, 120
  %v919 = vpop.permute.xlu0 %918
  %v920 = vsel %vm304, %v919, 0
  %922 = vmatpush.msra.mxu0 0.0
  %923 = vmatpush.msra.mxu0 0.0
  %924 = vmatpush.msra.mxu0 0.0
  %925 = vmatpush.msra.mxu0 0.0
  %926 = vmatpush.msra.mxu0 0.0
  %927 = vmatpush.msra.mxu0 0.0
  %928 = vmatpush.msra.mxu0 0.0
  %929 = vmatpush.msra.mxu0 0.0
  %930 = vmatpush.msra.mxu0 0.0
  %931 = vmatpush.msra.mxu0 0.0
  %932 = vmatpush.msra.mxu0 0.0
  %933 = vmatpush.msra.mxu0 0.0
  %934 = vmatpush.msra.mxu0 0.0
  %935 = vmatpush.msra.mxu0 0.0
  %936 = vmatpush.msra.mxu0 0.0
  %937 = vmatpush.msra.mxu0 %v764
  %938 = vmatmul.f32.gmra.mxu0 %v920
  %v939 = vpop.f32.mrf.mxu0
  %v940 = vadd.f32 0.0, %v939
  %941 = vdwg.mxu0
  %943 = vrot.lane.b32.xlu0 %v631, 120
  %v944 = vpop.permute.xlu0 %943
  %v945 = vsel %vm304, %v944, 0
  %947 = vmatpush.msra.mxu0 0.0
  %948 = vmatpush.msra.mxu0 0.0
  %949 = vmatpush.msra.mxu0 0.0
  %950 = vmatpush.msra.mxu0 0.0
  %951 = vmatpush.msra.mxu0 0.0
  %952 = vmatpush.msra.mxu0 0.0
  %953 = vmatpush.msra.mxu0 0.0
  %954 = vmatpush.msra.mxu0 0.0
  %955 = vmatpush.msra.mxu0 0.0
  %956 = vmatpush.msra.mxu0 0.0
  %957 = vmatpush.msra.mxu0 0.0
  %958 = vmatpush.msra.mxu0 0.0
  %959 = vmatpush.msra.mxu0 0.0
  %960 = vmatpush.msra.mxu0 0.0
  %961 = vmatpush.msra.mxu0 0.0
  %962 = vmatpush.msra.mxu0 %v766
  %963 = vmatmul.f32.gmra.mxu0 %v945
  %v964 = vpop.f32.mrf.mxu0
  %v965 = vadd.f32 0.0, %v964
  %966 = vdwg.mxu0
  %v967 = vrot.slane %v840, 4
  %v968 = vsel %vm655, %v967, %v790
  %v969 = vrot.slane %v790, 4
  %v970 = vsel %vm655, %v840, %v969
  %v972 = vunpack.c.l.s4 1983009808
  %v973 = vunpack.c.0.s8 %v972
  %v974 = vperm.slane %v968, %v973
  %v976 = vunpack.c.l.s4 1983009808
  %v977 = vunpack.c.0.s8 %v976
  %v978 = vperm.slane %v970, %v977
  %v979 = vrot.slane %v865, 4
  %v980 = vsel %vm655, %v979, %v815
  %v981 = vrot.slane %v815, 4
  %v982 = vsel %vm655, %v865, %v981
  %v984 = vunpack.c.l.s4 1983009808
  %v985 = vunpack.c.0.s8 %v984
  %v986 = vperm.slane %v980, %v985
  %v988 = vunpack.c.l.s4 1983009808
  %v989 = vunpack.c.0.s8 %v988
  %v990 = vperm.slane %v982, %v989
  %v991 = vrot.slane %v940, 4
  %v992 = vsel %vm655, %v991, %v890
  %v993 = vrot.slane %v890, 4
  %v994 = vsel %vm655, %v940, %v993
  %v996 = vunpack.c.l.s4 1983009808
  %v997 = vunpack.c.0.s8 %v996
  %v998 = vperm.slane %v992, %v997
  %v1000 = vunpack.c.l.s4 1983009808
  %v1001 = vunpack.c.0.s8 %v1000
  %v1002 = vperm.slane %v994, %v1001
  %v1003 = vrot.slane %v965, 4
  %v1004 = vsel %vm655, %v1003, %v915
  %v1005 = vrot.slane %v915, 4
  %v1006 = vsel %vm655, %v965, %v1005
  %v1008 = vunpack.c.l.s4 1983009808
  %v1009 = vunpack.c.0.s8 %v1008
  %v1010 = vperm.slane %v1004, %v1009
  %v1012 = vunpack.c.l.s4 1983009808
  %v1013 = vunpack.c.0.s8 %v1012
  %v1014 = vperm.slane %v1006, %v1013
  %v1015 = vrot.slane %v986, 4
  %v1016 = vsel %vm655, %v1015, %v974
  %v1017 = vrot.slane %v974, 4
  %v1018 = vsel %vm655, %v986, %v1017
  %v1020 = vunpack.c.l.s4 1934713408
  %v1021 = vunpack.c.0.s8 %v1020
  %v1022 = vperm.slane %v1016, %v1021
  %v1024 = vunpack.c.l.s4 1934713408
  %v1025 = vunpack.c.0.s8 %v1024
  %v1026 = vperm.slane %v1018, %v1025
  %v1027 = vrot.slane %v990, 4
  %v1028 = vsel %vm655, %v1027, %v978
  %v1029 = vrot.slane %v978, 4
  %v1030 = vsel %vm655, %v990, %v1029
  %v1032 = vunpack.c.l.s4 1934713408
  %v1033 = vunpack.c.0.s8 %v1032
  %v1034 = vperm.slane %v1028, %v1033
  %v1036 = vunpack.c.l.s4 1934713408
  %v1037 = vunpack.c.0.s8 %v1036
  %v1038 = vperm.slane %v1030, %v1037
  %v1039 = vrot.slane %v1010, 4
  %v1040 = vsel %vm655, %v1039, %v998
  %v1041 = vrot.slane %v998, 4
  %v1042 = vsel %vm655, %v1010, %v1041
  %v1044 = vunpack.c.l.s4 1934713408
  %v1045 = vunpack.c.0.s8 %v1044
  %v1046 = vperm.slane %v1040, %v1045
  %v1048 = vunpack.c.l.s4 1934713408
  %v1049 = vunpack.c.0.s8 %v1048
  %v1050 = vperm.slane %v1042, %v1049
  %v1051 = vrot.slane %v1014, 4
  %v1052 = vsel %vm655, %v1051, %v1002
  %v1053 = vrot.slane %v1002, 4
  %v1054 = vsel %vm655, %v1014, %v1053
  %v1056 = vunpack.c.l.s4 1934713408
  %v1057 = vunpack.c.0.s8 %v1056
  %v1058 = vperm.slane %v1052, %v1057
  %v1060 = vunpack.c.l.s4 1934713408
  %v1061 = vunpack.c.0.s8 %v1060
  %v1062 = vperm.slane %v1054, %v1061
  %v1063 = vrot.slane %v1046, 4
  %v1064 = vsel %vm655, %v1063, %v1022
  %v1065 = vrot.slane %v1022, 4
  %v1066 = vsel %vm655, %v1046, %v1065
  %v1067 = vrot.slane %v1050, 4
  %v1068 = vsel %vm655, %v1067, %v1026
  %v1069 = vrot.slane %v1026, 4
  %v1070 = vsel %vm655, %v1050, %v1069
  %v1071 = vrot.slane %v1058, 4
  %v1072 = vsel %vm655, %v1071, %v1034
  %v1073 = vrot.slane %v1034, 4
  %v1074 = vsel %vm655, %v1058, %v1073
  %v1075 = vrot.slane %v1062, 4
  %v1076 = vsel %vm655, %v1075, %v1038
  %v1077 = vrot.slane %v1038, 4
  %v1078 = vsel %vm655, %v1062, %v1077
  %1080 = vrot.lane.b32.xlu0 %v1066, 8
  %v1081 = vpop.permute.xlu0 %1080
  %1084 = vrot.lane.b32.xlu0 %v1068, 16
  %v1085 = vpop.permute.xlu0 %1084
  %1088 = vrot.lane.b32.xlu0 %v1070, 24
  %v1089 = vpop.permute.xlu0 %1088
  %1092 = vrot.lane.b32.xlu0 %v1072, 32
  %v1093 = vpop.permute.xlu0 %1092
  %1096 = vrot.lane.b32.xlu0 %v1074, 40
  %v1097 = vpop.permute.xlu0 %1096
  %1100 = vrot.lane.b32.xlu0 %v1076, 48
  %v1101 = vpop.permute.xlu0 %1100
  %1104 = vrot.lane.b32.xlu0 %v1078, 56
  %v1105 = vpop.permute.xlu0 %1104
  %v1107 = vsel %vm304, %v1064, %v1081
  %vm1108 = vcmask 130048
  %v1109 = vsel %vm1108, %v1107, %v1085
  %vm1110 = vcmask 195584
  %v1111 = vsel %vm1110, %v1109, %v1089
  %vm1112 = vcmask 261120
  %v1113 = vsel %vm1112, %v1111, %v1093
  %vm1114 = vcmask 326656
  %v1115 = vsel %vm1114, %v1113, %v1097
  %vm1116 = vcmask 392192
  %v1117 = vsel %vm1116, %v1115, %v1101
  %vm1118 = vcmask 457728
  %v1119 = vsel %vm1118, %v1117, %v1105
  %1120 = vst.msk [vmem:[%s2] sm:$0xff] %vm24, %v1119
  // Predicated region
  $region10: #{cwt4_conv_attention.1} parent=0 // pred_check
    _
  $region11: #{cwt4_conv_attention.1} parent=0 // pred_check_branch
    %1122 = sbr.rel (0) target = $region13
  $region12: #{cwt4_conv_attention.1} parent=0 // pred_region
    _
  $region13: #{cwt4_conv_attention.1} parent=0 // pred_fallthru
    _
  // Predicated region
  $region14: #{cwt4_conv_attention.1} parent=0 // pred_check
    _
  $region15: #{cwt4_conv_attention.1} parent=0 // pred_check_branch
    %1124 = sbr.rel (0) target = $region17
  $region16: #{cwt4_conv_attention.1} parent=0 // pred_region
    _
  $region17: #{cwt4_conv_attention.1} parent=0 // pred_fallthru
    _

</llo_original>
